<compile_context>
chip_gen: v5e
topology: v5e:2x2
jax: 0.10.0
libtpu: 0.0.40
codegen_flags: <defaults>
</compile_context>

<pallas_src>
import functools

import jax
import jax.numpy as jnp
from jax.experimental import pallas as pl
from jax.experimental.pallas import tpu as pltpu


def _round_up(x, m):
    return ((x + m - 1) // m) * m


def _conv_bn_mish_kernel(a_ref, w_ref, bias_ref, o_ref):
    # a_ref:    (tm, kdim_pad)  bf16 im2col patch tile
    # w_ref:    (kdim_pad, tn)  bf16 conv weight tile (BN scale pre-folded)
    # bias_ref: (1, tn)         f32 folded BN bias
    # o_ref:    (tm, tn)        f32 output tile
    acc = jnp.dot(a_ref[...], w_ref[...], preferred_element_type=jnp.float32)
    y = acc + bias_ref[...]

    # Mish(y) = y * tanh(softplus(y)) = y * t / (t + 2),  t = e^y * (e^y + 2).
    # One EUP exp + one approx reciprocal; clamp before exp so it never
    # overflows, and select y directly for y > 20 (mish(y) == y there in f32).
    yc = jnp.minimum(y, 20.0)
    e = jnp.exp(yc)
    t = e * (e + 2.0)
    mish = y * t * pl.reciprocal(t + 2.0, approx=True)
    o_ref[...] = jnp.where(y > 20.0, y, mish).astype(o_ref.dtype)


def _im2col_nchw(x, kernel_size, stride, padding):
    """Extract conv patches. Returns [N*OH*OW, Cin*K*K], columns in (ci,kh,kw) order."""
    n, cin, h, w = x.shape
    k = kernel_size
    xp = jnp.pad(x, ((0, 0), (0, 0), (padding, padding), (padding, padding)))
    oh = (h + 2 * padding - k) // stride + 1
    ow = (w + 2 * padding - k) // stride + 1
    slices = []
    for kh in range(k):
        for kw in range(k):
            s = xp[:, :, kh:kh + stride * oh:stride, kw:kw + stride * ow:stride]
            slices.append(s)  # [N, Cin, OH, OW]
    # [K*K, N, Cin, OH, OW] -> [N, OH, OW, Cin, K*K]; flatten (ci, kh, kw)
    patches = jnp.stack(slices, axis=0).transpose(1, 3, 4, 2, 0)
    return patches.reshape(n * oh * ow, cin * k * k), oh, ow


@functools.partial(jax.jit, static_argnames=("kernel_size", "stride"))
def basic_conv_forward(x, weight, gamma, beta, running_mean, running_var,
                       kernel_size, stride, eps=1e-5):
    """x: [N, Cin, H, W] (NCHW). weight: [Cout, Cin, K, K]. Returns [N, Cout, OH, OW]."""
    n, cin, h, w = x.shape
    cout = weight.shape[0]
    # kernel_size // 2 reproduces PyTorch's BasicConv padding only for odd K.
    assert kernel_size % 2 == 1, "BasicConv autopad assumes an odd kernel size"
    padding = kernel_size // 2
    kdim = cin * kernel_size * kernel_size

    # bf16 MXU operands; accumulation stays f32 inside the kernel.
    a, oh, ow = _im2col_nchw(x.astype(jnp.bfloat16), kernel_size, stride, padding)
    m = n * oh * ow

    # Fold BN (inference) into per-channel scale/bias, then fold the scale into
    # the weight columns so the in-kernel epilogue is a single bias add.
    scale = (gamma / jnp.sqrt(running_var + eps)).astype(jnp.float32)
    bias = beta.astype(jnp.float32) - running_mean.astype(jnp.float32) * scale
    w_mat = weight.reshape(cout, kdim).T.astype(jnp.float32) * scale[None, :]

    # Lane-dense padding: contraction dim and Cout to multiples of 128 so every
    # tile is full (8,128) vregs and the output stores are unmasked.
    kdim_pad = _round_up(kdim, 128)
    cout_pad = _round_up(cout, 128)

    # Row tile: big (amortize per-grid-step overhead), but keep >= 2 grid steps
    # along M when possible so both v7x TensorCores get work.
    tm = 512
    while tm > 128 and -(-m // tm) < 2:
        tm //= 2
    tn = min(256, cout_pad)
    m_pad = _round_up(m, tm)

    a_p = jnp.pad(a, ((0, m_pad - m), (0, kdim_pad - kdim)))
    w_p = jnp.pad(w_mat.astype(jnp.bfloat16),
                  ((0, kdim_pad - kdim), (0, cout_pad - cout)))
    bias_p = jnp.pad(bias.reshape(1, cout), ((0, 0), (0, cout_pad - cout)))

    grid = (m_pad // tm, cout_pad // tn)

    # Double-buffered A + W + output tiles, plus bias; generous headroom but
    # well inside v7x's 64 MiB VMEM.
    vmem_bytes = 2 * (tm * kdim_pad * 2 + kdim_pad * tn * 2 + tm * tn * 4) + cout_pad * 4
    vmem_limit = int(min(max(2 * vmem_bytes, 16 * 1024 * 1024), 100 * 1024 * 1024))

    out = pl.pallas_call(
        _conv_bn_mish_kernel,
        out_shape=jax.ShapeDtypeStruct((m_pad, cout_pad), jnp.float32),
        grid_spec=pltpu.PrefetchScalarGridSpec(
            num_scalar_prefetch=0,
            grid=grid,
            in_specs=[
                pl.BlockSpec((tm, kdim_pad), lambda i, j: (i, 0)),
                pl.BlockSpec((kdim_pad, tn), lambda i, j: (0, j)),
                pl.BlockSpec((1, tn), lambda i, j: (0, j)),
            ],
            out_specs=pl.BlockSpec((tm, tn), lambda i, j: (i, j)),
        ),
        compiler_params=pltpu.CompilerParams(
            dimension_semantics=("parallel", "parallel"),
            vmem_limit_bytes=vmem_limit),
    )(a_p, w_p, bias_p)

    out = out[:m, :cout].astype(x.dtype)                         # [N*OH*OW, Cout]
    # TODO(synk): skip this HBM-round-trip transpose if the consumer takes NHWC.
    return out.reshape(n, oh, ow, cout).transpose(0, 3, 1, 2)    # -> NCHW


def _reference(x, weight, gamma, beta, running_mean, running_var,
               kernel_size, stride, eps=1e-5):
    padding = kernel_size // 2
    y = jax.lax.conv_general_dilated(
        x, weight, window_strides=(stride, stride),
        padding=[(padding, padding), (padding, padding)],
        dimension_numbers=("NCHW", "OIHW", "NCHW"))
    scale = (gamma / jnp.sqrt(running_var + eps)).reshape(1, -1, 1, 1)
    bias = (beta - running_mean * gamma / jnp.sqrt(running_var + eps)).reshape(1, -1, 1, 1)
    y = y * scale + bias
    return y * jnp.tanh(jax.nn.softplus(y))


if __name__ == "__main__":
    key = jax.random.PRNGKey(0)
    k_x, k_w, k_g, k_b, k_m, k_v = jax.random.split(key, 6)

    N, Cin, H, W = 2, 4, 16, 16
    Cout, K, stride = 8, 3, 1

    x = jax.random.normal(k_x, (N, Cin, H, W), dtype=jnp.float32)
    weight = 0.1 * jax.random.normal(k_w, (Cout, Cin, K, K), dtype=jnp.float32)
    gamma = 1.0 + 0.1 * jax.random.normal(k_g, (Cout,), dtype=jnp.float32)
    beta = 0.1 * jax.random.normal(k_b, (Cout,), dtype=jnp.float32)
    running_mean = 0.1 * jax.random.normal(k_m, (Cout,), dtype=jnp.float32)
    running_var = jnp.abs(jax.random.normal(k_v, (Cout,), dtype=jnp.float32)) + 0.5

    out = basic_conv_forward(x, weight, gamma, beta, running_mean, running_var,
                             kernel_size=K, stride=stride)
    out = jax.block_until_ready(out)

    ref = _reference(x, weight, gamma, beta, running_mean, running_var,
                     kernel_size=K, stride=stride)
    assert out.shape == (N, Cout, H, W), out.shape
    # Tolerance loosened vs the f32 reference because the MXU operands are bf16
    # and the Mish reciprocal uses the approx EUP path.
    max_err = float(jnp.max(jnp.abs(out - ref)))
    assert jnp.allclose(out, ref, atol=3e-2, rtol=3e-2), max_err
    print("KERNEL_OK")
</pallas_src>

<mosaic_0001>
module attributes {stable_mosaic.version = 11 : i64} {
  func.func @_conv_bn_mish_kernel(%arg0: i32, %arg1: i32, %arg2: memref<256x128xbf16, #tpu.memory_space<vmem>>, %arg3: memref<128x128xbf16, #tpu.memory_space<vmem>>, %arg4: memref<1x128xf32, #tpu.memory_space<vmem>>, %arg5: memref<256x128xf32, #tpu.memory_space<vmem>>) attributes {dimension_semantics = [#tpu.dimension_semantics<parallel>, #tpu.dimension_semantics<parallel>], iteration_bounds = array<i64: 2, 1>, scalar_prefetch = 0 : i64, scratch_operands = 0 : i64, tpu.core_type = #tpu.core_type<tc>, window_params = [{transform_indices = @transform_0, window_bounds = array<i64: 256, 128>}, {transform_indices = @transform_1, window_bounds = array<i64: 128, 128>}, {transform_indices = @transform_2, window_bounds = array<i64: 1, 128>}, {transform_indices = @transform_3, window_bounds = array<i64: 256, 128>}]} {
    %c0 = arith.constant 0 : index
    %c0_0 = arith.constant 0 : index
    %0 = vector.load %arg2[%c0, %c0_0] : memref<256x128xbf16, #tpu.memory_space<vmem>>, vector<256x128xbf16>
    %c0_1 = arith.constant 0 : index
    %c0_2 = arith.constant 0 : index
    %1 = vector.load %arg3[%c0_1, %c0_2] : memref<128x128xbf16, #tpu.memory_space<vmem>>, vector<128x128xbf16>
    %cst = arith.constant dense<0.000000e+00> : vector<256x128xf32>
    %2 = tpu.matmul %0, %1, %cst {dimension_numbers = #tpu.dot_dimension_numbers<[1], [0], [0], [1], [0, 0, 1, 1], [], []>} : vector<256x128xbf16>, vector<128x128xbf16>, vector<256x128xf32> -> vector<256x128xf32>
    %c0_3 = arith.constant 0 : index
    %c0_4 = arith.constant 0 : index
    %3 = vector.load %arg4[%c0_3, %c0_4] : memref<1x128xf32, #tpu.memory_space<vmem>>, vector<1x128xf32>
    %4 = vector.broadcast %3 : vector<1x128xf32> to vector<256x128xf32>
    %5 = arith.addf %2, %4 : vector<256x128xf32>
    %cst_5 = arith.constant 2.000000e+01 : f32
    %6 = vector.broadcast %cst_5 : f32 to vector<256x128xf32>
    %7 = arith.minimumf %5, %6 : vector<256x128xf32>
    %8 = math.exp %7 : vector<256x128xf32>
    %cst_6 = arith.constant 2.000000e+00 : f32
    %9 = vector.broadcast %cst_6 : f32 to vector<256x128xf32>
    %10 = arith.addf %8, %9 : vector<256x128xf32>
    %11 = arith.mulf %8, %10 : vector<256x128xf32>
    %12 = arith.mulf %5, %11 : vector<256x128xf32>
    %cst_7 = arith.constant 2.000000e+00 : f32
    %13 = vector.broadcast %cst_7 : f32 to vector<256x128xf32>
    %14 = arith.addf %11, %13 : vector<256x128xf32>
    %15 = tpu.reciprocal %14 {approx = true} : vector<256x128xf32> -> vector<256x128xf32>
    %16 = arith.mulf %12, %15 : vector<256x128xf32>
    %cst_8 = arith.constant 2.000000e+01 : f32
    %17 = vector.broadcast %cst_8 : f32 to vector<256x128xf32>
    %18 = arith.cmpf ogt, %5, %17 : vector<256x128xf32>
    %19 = arith.select %18, %5, %16 : vector<256x128xi1>, vector<256x128xf32>
    %c0_9 = arith.constant 0 : index
    %c0_10 = arith.constant 0 : index
    %20 = vector.load %arg5[%c0_9, %c0_10] : memref<256x128xf32, #tpu.memory_space<vmem>>, vector<256x128xf32>
    tpu.vector_store %arg5[%c0_9, %c0_10], %19 {strides = array<i32>} : memref<256x128xf32, #tpu.memory_space<vmem>>, vector<256x128xf32>,
    return
  }
  func.func @transform_0(%arg0: i32, %arg1: i32) -> (i32, i32) {
    %c0_i32 = arith.constant 0 : i32
    %c0_i32_0 = arith.constant 0 : i32
    return %arg0, %c0_i32 : i32, i32
  }
  func.func @transform_1(%arg0: i32, %arg1: i32) -> (i32, i32) {
    %c0_i32 = arith.constant 0 : i32
    %c0_i32_0 = arith.constant 0 : i32
    return %c0_i32, %arg1 : i32, i32
  }
  func.func @transform_2(%arg0: i32, %arg1: i32) -> (i32, i32) {
    %c0_i32 = arith.constant 0 : i32
    %c0_i32_0 = arith.constant 0 : i32
    return %c0_i32, %arg1 : i32, i32
  }
  func.func @transform_3(%arg0: i32, %arg1: i32) -> (i32, i32) {
    %c0_i32 = arith.constant 0 : i32
    return %arg0, %arg1 : i32, i32
  }
}

</mosaic_0001>

<llo_original>
// kernel: basic_conv_forward.1
$region0: #{basic_conv_forward.1}
  #allocation0 [shape = 'u32[]', space=smem, size = 0x4, offset = 0x4, fixed_abs, tag = 'smem constant byte address 0x4 - core index']
  #allocation1 [shape = 'u32[72,128]{1,0:T(1,128)}', space=vmem, size = 0x9000, scoped, tag = 'internal scratch']
  %s0 = inlined_call_operand.vmem [shape: bf16[512,128], index: 0, kind: input, shape index: {}]
  %s1 = inlined_call_operand.vmem [shape: bf16[128,128], index: 1, kind: input, shape index: {}]
  %s2 = inlined_call_operand.vmem [shape: f32[1,128], index: 2, kind: input, shape index: {}]
  %s3 = inlined_call_operand.vmem [shape: f32[512,128], index: 3, kind: output, shape index: {}]
  %s4 = sld [smem:[#allocation0]]
  $region45: #{basic_conv_forward.1} parent=0
    _
  %s6 = ssub.s32 1, %s4
  %s7 = scalar_select 0, %s6, %s4
  loop: start=0, step=1, limit=4
  $region2: #{basic_conv_forward.1} parent=0 // loop_pre_header
    _
  $region3: #{basic_conv_forward.1} parent=0 // loop_header
    %s9 = sphi 0, %s13
    %p10 = scmp.ge.s32.totalorder %s9, 4
    %s16 = sphi 0, %s28
    %s17 = sphi 0, %s24
    %s18 = sphi 0, %s16
    %s19 = sphi 0, %s17
    %s20 = sphi 0, %s18
    %s21 = sphi 0, %s19
    %s31 = sphi 0, %s33
    %s34 = sphi 0, %s31
    %s35 = sphi 0, %s34
    %s51 = sphi 0, %s35
    %s57 = sphi 0, %s59
    %s60 = sphi 0, %s57
    %s61 = sphi 0, %s60
    %s77 = sphi 0, %s61
    %s83 = sphi 0, %s85
    %s86 = sphi 0, %s83
    %s87 = sphi 0, %s86
    %s103 = sphi 0, %s87
    %s111 = sphi 0, %s113
    %s114 = sphi 0, %s111
    %s115 = sphi 0, %s114
    %s131 = sphi 0, %s115
  $region4: #{basic_conv_forward.1} parent=0 // loop_header_branch
    %12 = sbr.rel (%p10) target = $region8
  $region5: #{basic_conv_forward.1} parent=0 // loop_body
    %s14 = ssub.s32 %s9, 1
    %s15 = ssub.s32 %s9, 2
    %s22 = sadd.s32 1, %s17
    %p23 = scmp.ge.s32.totalorder %s22, 1
    %s24 = scalar_select %p23, 0, %s22
    %s25 = sadd.s32 1, %s16
    %s26 = scalar_select %p23, %s25, %s16
    %p27 = scmp.ge.s32.totalorder %s26, 2
    %s28 = scalar_select %p27, 0, %s26
    %s29 = ssub.s32 %s16, %s28
    %p30 = scmp.eq.s32.totalorder %s29, 0
    %s32 = sadd.s32 %s31, 1
    %s33 = scalar_select %p30, %s31, %s32
    %p36 = pneg %p30
    %p37 = scmp.eq.s32.totalorder %s9, 1
    %p38 = por %p36, %p37
    %p39 = scmp.ne.s32.totalorder %s31, %s34
    %p40 = scmp.eq.s32.totalorder %s9, 0
    %p41 = por %p39, %p40
    %p42 = scmp.ne.s32.totalorder %s31, %s34
    %p43 = scmp.eq.s32.totalorder %s14, 1
    %p44 = por %p42, %p43
    %p45 = scmp.ne.s32.totalorder %s34, %s35
    %p46 = scmp.eq.s32.totalorder %s14, 0
    %p47 = por %p45, %p46
    %p48 = scmp.ne.s32.totalorder %s34, %s35
    %p49 = scmp.eq.s32.totalorder %s15, 1
    %p50 = por %p48, %p49
    %p52 = scmp.ne.s32.totalorder %s35, %s51
    %p53 = scmp.eq.s32.totalorder %s15, 0
    %p54 = por %p52, %p53
    %s55 = ssub.s32 %s17, %s24
    %p56 = scmp.eq.s32.totalorder %s55, 0
    %s58 = sadd.s32 %s57, 1
    %s59 = scalar_select %p56, %s57, %s58
    %p62 = pneg %p56
    %p63 = scmp.eq.s32.totalorder %s9, 1
    %p64 = por %p62, %p63
    %p65 = scmp.ne.s32.totalorder %s57, %s60
    %p66 = scmp.eq.s32.totalorder %s9, 0
    %p67 = por %p65, %p66
    %p68 = scmp.ne.s32.totalorder %s57, %s60
    %p69 = scmp.eq.s32.totalorder %s14, 1
    %p70 = por %p68, %p69
    %p71 = scmp.ne.s32.totalorder %s60, %s61
    %p72 = scmp.eq.s32.totalorder %s14, 0
    %p73 = por %p71, %p72
    %p74 = scmp.ne.s32.totalorder %s60, %s61
    %p75 = scmp.eq.s32.totalorder %s15, 1
    %p76 = por %p74, %p75
    %p78 = scmp.ne.s32.totalorder %s61, %s77
    %p79 = scmp.eq.s32.totalorder %s15, 0
    %p80 = por %p78, %p79
    %s81 = ssub.s32 %s17, %s24
    %p82 = scmp.eq.s32.totalorder %s81, 0
    %s84 = sadd.s32 %s83, 1
    %s85 = scalar_select %p82, %s83, %s84
    %p88 = pneg %p82
    %p89 = scmp.eq.s32.totalorder %s9, 1
    %p90 = por %p88, %p89
    %p91 = scmp.ne.s32.totalorder %s83, %s86
    %p92 = scmp.eq.s32.totalorder %s9, 0
    %p93 = por %p91, %p92
    %p94 = scmp.ne.s32.totalorder %s83, %s86
    %p95 = scmp.eq.s32.totalorder %s14, 1
    %p96 = por %p94, %p95
    %p97 = scmp.ne.s32.totalorder %s86, %s87
    %p98 = scmp.eq.s32.totalorder %s14, 0
    %p99 = por %p97, %p98
    %p100 = scmp.ne.s32.totalorder %s86, %s87
    %p101 = scmp.eq.s32.totalorder %s15, 1
    %p102 = por %p100, %p101
    %p104 = scmp.ne.s32.totalorder %s87, %s103
    %p105 = scmp.eq.s32.totalorder %s15, 0
    %p106 = por %p104, %p105
    %s107 = ssub.s32 %s16, %s28
    %s108 = ssub.s32 %s17, %s24
    %s109 = sor.u32 %s107, %s108
    %p110 = scmp.eq.s32.totalorder %s109, 0
    %s112 = sadd.s32 %s111, 1
    %s113 = scalar_select %p110, %s111, %s112
    %p116 = pneg %p110
    %p117 = scmp.eq.s32.totalorder %s9, 1
    %p118 = por %p116, %p117
    %p119 = scmp.ne.s32.totalorder %s111, %s114
    %p120 = scmp.eq.s32.totalorder %s9, 0
    %p121 = por %p119, %p120
    %p122 = scmp.ne.s32.totalorder %s111, %s114
    %p123 = scmp.eq.s32.totalorder %s14, 1
    %p124 = por %p122, %p123
    %p125 = scmp.ne.s32.totalorder %s114, %s115
    %p126 = scmp.eq.s32.totalorder %s14, 0
    %p127 = por %p125, %p126
    %p128 = scmp.ne.s32.totalorder %s114, %s115
    %p129 = scmp.eq.s32.totalorder %s15, 1
    %p130 = por %p128, %p129
    %p132 = scmp.ne.s32.totalorder %s115, %s131
    %p133 = scmp.eq.s32.totalorder %s15, 0
    %p134 = por %p132, %p133
    %p135 = scmp.le.s32.totalorder 1, %s9
    %p136 = scmp.lt.s32.totalorder %s9, 3
    %p137 = pnand %p135, %p136
    %p138 = pneg %p137
    // Predicated region
    $region9: #{basic_conv_forward.1} parent=5 // pred_check
      _
    $region10: #{basic_conv_forward.1} parent=5 // pred_check_branch
      %140 = sbr.rel (%p137) target = $region12
    $region11: #{basic_conv_forward.1} parent=5 // pred_region
      %s141 = ssub.s32 %s9, 1
      // Predicated region
      $region13: #{basic_conv_forward.1} parent=11 // pred_check
        %p142 = pneg %p73
      $region14: #{basic_conv_forward.1} parent=11 // pred_check_branch
        %144 = sbr.rel (%p142) target = $region16
      $region15: #{basic_conv_forward.1} parent=11 // pred_region
        %p145 = scmp.lt.s32.totalorder %s19, 0
        %s146 = scalar_select %p145, %s19, 0
        %s147 = smul.addr %s146, 4
        %s148 = scalar_lea.vmem %s1, %s147
      $region16: #{basic_conv_forward.1} parent=11 // pred_fallthru
        _
      // Predicated region
      $region17: #{basic_conv_forward.1} parent=11 // pred_check
        %p149 = pneg %p99
      $region18: #{basic_conv_forward.1} parent=11 // pred_check_branch
        %151 = sbr.rel (%p149) target = $region20
      $region19: #{basic_conv_forward.1} parent=11 // pred_region
        %p152 = scmp.lt.s32.totalorder %s19, 0
        %s153 = scalar_select %p152, %s19, 0
        %s154 = scalar_lea.vmem %s2, %s153
      $region20: #{basic_conv_forward.1} parent=11 // pred_fallthru
        _
    $region12: #{basic_conv_forward.1} parent=5 // pred_fallthru
      _
    %p155 = scmp.lt.s32.totalorder %s9, 2
    // Predicated region
    $region21: #{basic_conv_forward.1} parent=5 // pred_check
      %p156 = pneg %p155
    $region22: #{basic_conv_forward.1} parent=5 // pred_check_branch
      %158 = sbr.rel (%p156) target = $region24
    $region23: #{basic_conv_forward.1} parent=5 // pred_region
      // Predicated region
      $region25: #{basic_conv_forward.1} parent=23 // pred_check
        %p159 = pneg %p41
      $region26: #{basic_conv_forward.1} parent=23 // pred_check_branch
        %161 = sbr.rel (%p159) target = $region28
      $region27: #{basic_conv_forward.1} parent=23 // pred_region
        %s162 = smul.u32 32, %s16
        %p163 = scmp.lt.s32.totalorder %s162, 63
        %s164 = scalar_select %p163, %s162, 63
        %s165 = smul.addr %s164, 4
        %s166 = scalar_lea.vmem %s0, %s165
        %s167 = smul.u32 32, %s16
      $region28: #{basic_conv_forward.1} parent=23 // pred_fallthru
        _
    $region24: #{basic_conv_forward.1} parent=5 // pred_fallthru
      _
    %p168 = scmp.le.s32.totalorder 1, %s9
    %p169 = scmp.lt.s32.totalorder %s9, 3
    %p170 = pnand %p168, %p169
    %p171 = pneg %p170
    // Predicated region
    $region29: #{basic_conv_forward.1} parent=5 // pred_check
      _
    $region30: #{basic_conv_forward.1} parent=5 // pred_check_branch
      %173 = sbr.rel (%p170) target = $region32
    $region31: #{basic_conv_forward.1} parent=5 // pred_region
      %s174 = ssub.s32 %s9, 1
      %s175 = smul.u32 32, %s18
      %p176 = scmp.lt.s32.totalorder %s175, 63
      %s177 = scalar_select %p176, %s175, 63
      %s178 = smul.addr %s177, 4
      %s179 = scalar_lea.vmem %s0, %s178
      %p180 = pneg %p47
      %p181 = pneg %p44
      %p182 = scmp.lt.s32.totalorder %s19, 0
      %s183 = scalar_select %p182, %s19, 0
      %s184 = smul.addr %s183, 4
      %s185 = scalar_lea.vmem %s1, %s184
      %p186 = pneg %p73
      %p187 = pneg %p70
      %p188 = scmp.lt.s32.totalorder %s19, 0
      %s189 = scalar_select %p188, %s19, 0
      %s190 = scalar_lea.vmem %s2, %s189
      %p191 = pneg %p99
      %p192 = pneg %p96
      %p193 = pneg %p127
      %p194 = pneg %p124
      %s195 = smul.u32 32, %s18
      %p196 = scmp.lt.s32.totalorder %s195, 63
      %s197 = scalar_select %p196, %s195, 63
      %p198 = scmp.lt.s32.totalorder %s19, 0
      %s199 = scalar_select %p198, %s19, 0
      %s200 = sadd.s32 %s199, %s197
      %s201 = smul.addr %s200, 8
      %s202 = scalar_lea.vmem %s3, %s201
      %s203 = smul.u32 32, %s18
      %p204 = scmp.lt.s32.totalorder %s203, 63
      %s205 = scalar_select %p204, %s203, 63
      %s206 = smul.addr %s205, 4
      %s207 = scalar_lea.vmem %s0, %s206
      %s208 = smul.u32 32, %s18
      %p209 = scmp.lt.s32.totalorder %s19, 0
      %s210 = scalar_select %p209, %s19, 0
      %s211 = smul.addr %s210, 4
      %s212 = scalar_lea.vmem %s1, %s211
      %p213 = scmp.lt.s32.totalorder %s19, 0
      %s214 = scalar_select %p213, %s19, 0
      %s215 = scalar_lea.vmem %s2, %s214
      %s216 = smul.u32 32, %s18
      %p217 = scmp.lt.s32.totalorder %s216, 63
      %s218 = scalar_select %p217, %s216, 63
      %p219 = scmp.lt.s32.totalorder %s19, 0
      %s220 = scalar_select %p219, %s19, 0
      %s221 = sadd.s32 %s220, %s218
      %s222 = smul.addr %s221, 8
      %s223 = scalar_lea.vmem %s3, %s222
      %s224 = smul.u32 32, %s18
      %v225 = vld [vmem:[%s207] sm:$0xf]
      %v226 = vld [vmem:[%s207 + $0x4] sm:$0xf]
      %v227 = vld [vmem:[%s207 + $0x8] sm:$0xf]
      %v228 = vld [vmem:[%s207 + $0xc] sm:$0xf]
      %v229 = vld [vmem:[%s207 + $0x10] sm:$0xf]
      %v230 = vld [vmem:[%s207 + $0x14] sm:$0xf]
      %v231 = vld [vmem:[%s207 + $0x18] sm:$0xf]
      %v232 = vld [vmem:[%s207 + $0x1c] sm:$0xf]
      %v233 = vld [vmem:[%s207 + $0x20] sm:$0xf]
      %v234 = vld [vmem:[%s207 + $0x24] sm:$0xf]
      %v235 = vld [vmem:[%s207 + $0x28] sm:$0xf]
      %v236 = vld [vmem:[%s207 + $0x2c] sm:$0xf]
      %v237 = vld [vmem:[%s207 + $0x30] sm:$0xf]
      %v238 = vld [vmem:[%s207 + $0x34] sm:$0xf]
      %v239 = vld [vmem:[%s207 + $0x38] sm:$0xf]
      %v240 = vld [vmem:[%s207 + $0x3c] sm:$0xf]
      %v241 = vld [vmem:[%s207 + $0x40] sm:$0xf]
      %v242 = vld [vmem:[%s207 + $0x44] sm:$0xf]
      %v243 = vld [vmem:[%s207 + $0x48] sm:$0xf]
      %v244 = vld [vmem:[%s207 + $0x4c] sm:$0xf]
      %v245 = vld [vmem:[%s207 + $0x50] sm:$0xf]
      %v246 = vld [vmem:[%s207 + $0x54] sm:$0xf]
      %v247 = vld [vmem:[%s207 + $0x58] sm:$0xf]
      %v248 = vld [vmem:[%s207 + $0x5c] sm:$0xf]
      %v249 = vld [vmem:[%s207 + $0x60] sm:$0xf]
      %v250 = vld [vmem:[%s207 + $0x64] sm:$0xf]
      %v251 = vld [vmem:[%s207 + $0x68] sm:$0xf]
      %v252 = vld [vmem:[%s207 + $0x6c] sm:$0xf]
      %v253 = vld [vmem:[%s207 + $0x70] sm:$0xf]
      %v254 = vld [vmem:[%s207 + $0x74] sm:$0xf]
      %v255 = vld [vmem:[%s207 + $0x78] sm:$0xf]
      %v256 = vld [vmem:[%s207 + $0x7c] sm:$0xf]
      %v257 = vld [vmem:[%s212] sm:$0xf]
      %v258 = vld [vmem:[%s212 + $0x4] sm:$0xf]
      %v259 = vld [vmem:[%s212 + $0x8] sm:$0xf]
      %v260 = vld [vmem:[%s212 + $0xc] sm:$0xf]
      %v261 = vld [vmem:[%s212 + $0x10] sm:$0xf]
      %v262 = vld [vmem:[%s212 + $0x14] sm:$0xf]
      %v263 = vld [vmem:[%s212 + $0x18] sm:$0xf]
      %v264 = vld [vmem:[%s212 + $0x1c] sm:$0xf]
      %v265 = vld [vmem:[%s212 + $0x20] sm:$0xf]
      %v266 = vld [vmem:[%s212 + $0x24] sm:$0xf]
      %v267 = vld [vmem:[%s212 + $0x28] sm:$0xf]
      %v268 = vld [vmem:[%s212 + $0x2c] sm:$0xf]
      %v269 = vld [vmem:[%s212 + $0x30] sm:$0xf]
      %v270 = vld [vmem:[%s212 + $0x34] sm:$0xf]
      %v271 = vld [vmem:[%s212 + $0x38] sm:$0xf]
      %v272 = vld [vmem:[%s212 + $0x3c] sm:$0xf]
      %v273 = vld [vmem:[%s215] sm:$0x1]
      %v275 = vperm.slane %v273, 0
      %v309 = vunpack.c.l.b16 %v225
      %v310 = vunpack.c.l.b16 %v226
      %v311 = vunpack.c.l.b16 %v227
      %v312 = vunpack.c.l.b16 %v228
      %v313 = vunpack.c.l.b16 %v229
      %v314 = vunpack.c.l.b16 %v230
      %v315 = vunpack.c.l.b16 %v231
      %v316 = vunpack.c.l.b16 %v232
      %v317 = vunpack.c.l.b16 %v233
      %v318 = vunpack.c.l.b16 %v234
      %v319 = vunpack.c.l.b16 %v235
      %v320 = vunpack.c.l.b16 %v236
      %v321 = vunpack.c.l.b16 %v237
      %v322 = vunpack.c.l.b16 %v238
      %v323 = vunpack.c.l.b16 %v239
      %v324 = vunpack.c.l.b16 %v240
      %v325 = vunpack.c.l.b16 %v241
      %v326 = vunpack.c.l.b16 %v242
      %v327 = vunpack.c.l.b16 %v243
      %v328 = vunpack.c.l.b16 %v244
      %v329 = vunpack.c.l.b16 %v245
      %v330 = vunpack.c.l.b16 %v246
      %v331 = vunpack.c.l.b16 %v247
      %v332 = vunpack.c.l.b16 %v248
      %v333 = vunpack.c.l.b16 %v249
      %v334 = vunpack.c.l.b16 %v250
      %v335 = vunpack.c.l.b16 %v251
      %v336 = vunpack.c.l.b16 %v252
      %v337 = vunpack.c.l.b16 %v253
      %v338 = vunpack.c.l.b16 %v254
      %v339 = vunpack.c.l.b16 %v255
      %v340 = vunpack.c.l.b16 %v256
      %v341 = vpack.c.b16 %v310, %v309
      %v342 = vpack.c.b16 %v312, %v311
      %v343 = vpack.c.b16 %v314, %v313
      %v344 = vpack.c.b16 %v316, %v315
      %v345 = vpack.c.b16 %v318, %v317
      %v346 = vpack.c.b16 %v320, %v319
      %v347 = vpack.c.b16 %v322, %v321
      %v348 = vpack.c.b16 %v324, %v323
      %v349 = vpack.c.b16 %v326, %v325
      %v350 = vpack.c.b16 %v328, %v327
      %v351 = vpack.c.b16 %v330, %v329
      %v352 = vpack.c.b16 %v332, %v331
      %v353 = vpack.c.b16 %v334, %v333
      %v354 = vpack.c.b16 %v336, %v335
      %v355 = vpack.c.b16 %v338, %v337
      %v356 = vpack.c.b16 %v340, %v339
      %v389 = vunpack.c.l.b16 %v257
      %v390 = vunpack.c.l.b16 %v258
      %v391 = vunpack.c.l.b16 %v259
      %v392 = vunpack.c.l.b16 %v260
      %v393 = vunpack.c.l.b16 %v261
      %v394 = vunpack.c.l.b16 %v262
      %v395 = vunpack.c.l.b16 %v263
      %v396 = vunpack.c.l.b16 %v264
      %v397 = vunpack.c.l.b16 %v265
      %v398 = vunpack.c.l.b16 %v266
      %v399 = vunpack.c.l.b16 %v267
      %v400 = vunpack.c.l.b16 %v268
      %v401 = vunpack.c.l.b16 %v269
      %v402 = vunpack.c.l.b16 %v270
      %v403 = vunpack.c.l.b16 %v271
      %v404 = vunpack.c.l.b16 %v272
      %v405 = vpack.c.b16 %v390, %v389
      %v406 = vpack.c.b16 %v392, %v391
      %v407 = vpack.c.b16 %v394, %v393
      %v408 = vpack.c.b16 %v396, %v395
      %v409 = vpack.c.b16 %v398, %v397
      %v410 = vpack.c.b16 %v400, %v399
      %v411 = vpack.c.b16 %v402, %v401
      %v412 = vpack.c.b16 %v404, %v403
      %421 = vmatpush.bf16.msra.mxu0 %v412
      %422 = vmatpush.bf16.msra.mxu0 %v411
      %423 = vmatpush.bf16.msra.mxu0 %v410
      %424 = vmatpush.bf16.msra.mxu0 %v409
      %425 = vmatpush.bf16.msra.mxu0 %v408
      %426 = vmatpush.bf16.msra.mxu0 %v407
      %427 = vmatpush.bf16.msra.mxu0 %v406
      %428 = vmatpush.bf16.msra.mxu0 %v405
      %429 = vmatmul.bf16.gmra.mxu0 %v341
      %v430 = vpop.f32.mrf.mxu0
      %v431 = vadd.f32 %v275, %v430
      %v432 = vpop.f32.mrf.mxu0
      %v433 = vadd.f32 %v275, %v432
      %434 = vmatmul.bf16.gmra.mxu0 %v342
      %v435 = vpop.f32.mrf.mxu0
      %v436 = vadd.f32 %v275, %v435
      %v437 = vpop.f32.mrf.mxu0
      %v438 = vadd.f32 %v275, %v437
      %439 = vmatmul.bf16.gmra.mxu0 %v343
      %v440 = vpop.f32.mrf.mxu0
      %v441 = vadd.f32 %v275, %v440
      %v442 = vpop.f32.mrf.mxu0
      %v443 = vadd.f32 %v275, %v442
      %444 = vmatmul.bf16.gmra.mxu0 %v344
      %v445 = vpop.f32.mrf.mxu0
      %v446 = vadd.f32 %v275, %v445
      %v447 = vpop.f32.mrf.mxu0
      %v448 = vadd.f32 %v275, %v447
      %449 = vmatmul.bf16.gmra.mxu0 %v345
      %v450 = vpop.f32.mrf.mxu0
      %v451 = vadd.f32 %v275, %v450
      %v452 = vpop.f32.mrf.mxu0
      %v453 = vadd.f32 %v275, %v452
      %454 = vmatmul.bf16.gmra.mxu0 %v346
      %v455 = vpop.f32.mrf.mxu0
      %v456 = vadd.f32 %v275, %v455
      %v457 = vpop.f32.mrf.mxu0
      %v458 = vadd.f32 %v275, %v457
      %459 = vmatmul.bf16.gmra.mxu0 %v347
      %v460 = vpop.f32.mrf.mxu0
      %v461 = vadd.f32 %v275, %v460
      %v462 = vpop.f32.mrf.mxu0
      %v463 = vadd.f32 %v275, %v462
      %464 = vmatmul.bf16.gmra.mxu0 %v348
      %v465 = vpop.f32.mrf.mxu0
      %v466 = vadd.f32 %v275, %v465
      %v467 = vpop.f32.mrf.mxu0
      %v468 = vadd.f32 %v275, %v467
      %469 = vmatmul.bf16.gmra.mxu0 %v349
      %v470 = vpop.f32.mrf.mxu0
      %v471 = vadd.f32 %v275, %v470
      %v472 = vpop.f32.mrf.mxu0
      %v473 = vadd.f32 %v275, %v472
      %474 = vmatmul.bf16.gmra.mxu0 %v350
      %v475 = vpop.f32.mrf.mxu0
      %v476 = vadd.f32 %v275, %v475
      %v477 = vpop.f32.mrf.mxu0
      %v478 = vadd.f32 %v275, %v477
      %479 = vmatmul.bf16.gmra.mxu0 %v351
      %v480 = vpop.f32.mrf.mxu0
      %v481 = vadd.f32 %v275, %v480
      %v482 = vpop.f32.mrf.mxu0
      %v483 = vadd.f32 %v275, %v482
      %484 = vmatmul.bf16.gmra.mxu0 %v352
      %v485 = vpop.f32.mrf.mxu0
      %v486 = vadd.f32 %v275, %v485
      %v487 = vpop.f32.mrf.mxu0
      %v488 = vadd.f32 %v275, %v487
      %489 = vmatmul.bf16.gmra.mxu0 %v353
      %v490 = vpop.f32.mrf.mxu0
      %v491 = vadd.f32 %v275, %v490
      %v492 = vpop.f32.mrf.mxu0
      %v493 = vadd.f32 %v275, %v492
      %494 = vmatmul.bf16.gmra.mxu0 %v354
      %v495 = vpop.f32.mrf.mxu0
      %v496 = vadd.f32 %v275, %v495
      %v497 = vpop.f32.mrf.mxu0
      %v498 = vadd.f32 %v275, %v497
      %499 = vmatmul.bf16.gmra.mxu0 %v355
      %v500 = vpop.f32.mrf.mxu0
      %v501 = vadd.f32 %v275, %v500
      %v502 = vpop.f32.mrf.mxu0
      %v503 = vadd.f32 %v275, %v502
      %504 = vmatmul.bf16.gmra.mxu0 %v356
      %v505 = vpop.f32.mrf.mxu0
      %v506 = vadd.f32 %v275, %v505
      %v507 = vpop.f32.mrf.mxu0
      %v508 = vadd.f32 %v275, %v507
      %509 = vdwg.mxu0
      %v510 = vmin.f32 %v431, 20.0
      %v511 = vmin.f32 %v433, 20.0
      %v512 = vmin.f32 %v436, 20.0
      %v513 = vmin.f32 %v438, 20.0
      %v514 = vmin.f32 %v441, 20.0
      %v515 = vmin.f32 %v443, 20.0
      %v516 = vmin.f32 %v446, 20.0
      %v517 = vmin.f32 %v448, 20.0
      %v518 = vmin.f32 %v451, 20.0
      %v519 = vmin.f32 %v453, 20.0
      %v520 = vmin.f32 %v456, 20.0
      %v521 = vmin.f32 %v458, 20.0
      %v522 = vmin.f32 %v461, 20.0
      %v523 = vmin.f32 %v463, 20.0
      %v524 = vmin.f32 %v466, 20.0
      %v525 = vmin.f32 %v468, 20.0
      %v526 = vmin.f32 %v471, 20.0
      %v527 = vmin.f32 %v473, 20.0
      %v528 = vmin.f32 %v476, 20.0
      %v529 = vmin.f32 %v478, 20.0
      %v530 = vmin.f32 %v481, 20.0
      %v531 = vmin.f32 %v483, 20.0
      %v532 = vmin.f32 %v486, 20.0
      %v533 = vmin.f32 %v488, 20.0
      %v534 = vmin.f32 %v491, 20.0
      %v535 = vmin.f32 %v493, 20.0
      %v536 = vmin.f32 %v496, 20.0
      %v537 = vmin.f32 %v498, 20.0
      %v538 = vmin.f32 %v501, 20.0
      %v539 = vmin.f32 %v503, 20.0
      %v540 = vmin.f32 %v506, 20.0
      %v541 = vmin.f32 %v508, 20.0
      %v542 = vmul.f32 %v510, 1.442695
      %v543 = vpow.pop %v542
      %v544 = vmul.f32 %v511, 1.442695
      %v545 = vpow.pop %v544
      %v546 = vmul.f32 %v512, 1.442695
      %v547 = vpow.pop %v546
      %v548 = vmul.f32 %v513, 1.442695
      %v549 = vpow.pop %v548
      %v550 = vmul.f32 %v514, 1.442695
      %v551 = vpow.pop %v550
      %v552 = vmul.f32 %v515, 1.442695
      %v553 = vpow.pop %v552
      %v554 = vmul.f32 %v516, 1.442695
      %v555 = vpow.pop %v554
      %v556 = vmul.f32 %v517, 1.442695
      %v557 = vpow.pop %v556
      %v558 = vmul.f32 %v518, 1.442695
      %v559 = vpow.pop %v558
      %v560 = vmul.f32 %v519, 1.442695
      %v561 = vpow.pop %v560
      %v562 = vmul.f32 %v520, 1.442695
      %v563 = vpow.pop %v562
      %v564 = vmul.f32 %v521, 1.442695
      %v565 = vpow.pop %v564
      %v566 = vmul.f32 %v522, 1.442695
      %v567 = vpow.pop %v566
      %v568 = vmul.f32 %v523, 1.442695
      %v569 = vpow.pop %v568
      %v570 = vmul.f32 %v524, 1.442695
      %v571 = vpow.pop %v570
      %v572 = vmul.f32 %v525, 1.442695
      %v573 = vpow.pop %v572
      %v574 = vmul.f32 %v526, 1.442695
      %v575 = vpow.pop %v574
      %v576 = vmul.f32 %v527, 1.442695
      %v577 = vpow.pop %v576
      %v578 = vmul.f32 %v528, 1.442695
      %v579 = vpow.pop %v578
      %v580 = vmul.f32 %v529, 1.442695
      %v581 = vpow.pop %v580
      %v582 = vmul.f32 %v530, 1.442695
      %v583 = vpow.pop %v582
      %v584 = vmul.f32 %v531, 1.442695
      %v585 = vpow.pop %v584
      %v586 = vmul.f32 %v532, 1.442695
      %v587 = vpow.pop %v586
      %v588 = vmul.f32 %v533, 1.442695
      %v589 = vpow.pop %v588
      %v590 = vmul.f32 %v534, 1.442695
      %v591 = vpow.pop %v590
      %v592 = vmul.f32 %v535, 1.442695
      %v593 = vpow.pop %v592
      %v594 = vmul.f32 %v536, 1.442695
      %v595 = vpow.pop %v594
      %v596 = vmul.f32 %v537, 1.442695
      %v597 = vpow.pop %v596
      %v598 = vmul.f32 %v538, 1.442695
      %v599 = vpow.pop %v598
      %v600 = vmul.f32 %v539, 1.442695
      %v601 = vpow.pop %v600
      %v602 = vmul.f32 %v540, 1.442695
      %v603 = vpow.pop %v602
      %v604 = vmul.f32 %v541, 1.442695
      %v605 = vpow.pop %v604
      %v606 = vadd.f32 %v543, 2.0
      %v607 = vadd.f32 %v545, 2.0
      %v608 = vadd.f32 %v547, 2.0
      %v609 = vadd.f32 %v549, 2.0
      %v610 = vadd.f32 %v551, 2.0
      %v611 = vadd.f32 %v553, 2.0
      %v612 = vadd.f32 %v555, 2.0
      %v613 = vadd.f32 %v557, 2.0
      %v614 = vadd.f32 %v559, 2.0
      %v615 = vadd.f32 %v561, 2.0
      %v616 = vadd.f32 %v563, 2.0
      %v617 = vadd.f32 %v565, 2.0
      %v618 = vadd.f32 %v567, 2.0
      %v619 = vadd.f32 %v569, 2.0
      %v620 = vadd.f32 %v571, 2.0
      %v621 = vadd.f32 %v573, 2.0
      %v622 = vadd.f32 %v575, 2.0
      %v623 = vadd.f32 %v577, 2.0
      %v624 = vadd.f32 %v579, 2.0
      %v625 = vadd.f32 %v581, 2.0
      %v626 = vadd.f32 %v583, 2.0
      %v627 = vadd.f32 %v585, 2.0
      %v628 = vadd.f32 %v587, 2.0
      %v629 = vadd.f32 %v589, 2.0
      %v630 = vadd.f32 %v591, 2.0
      %v631 = vadd.f32 %v593, 2.0
      %v632 = vadd.f32 %v595, 2.0
      %v633 = vadd.f32 %v597, 2.0
      %v634 = vadd.f32 %v599, 2.0
      %v635 = vadd.f32 %v601, 2.0
      %v636 = vadd.f32 %v603, 2.0
      %v637 = vadd.f32 %v605, 2.0
      %v638 = vmul.f32 %v543, %v606
      %v639 = vmul.f32 %v545, %v607
      %v640 = vmul.f32 %v547, %v608
      %v641 = vmul.f32 %v549, %v609
      %v642 = vmul.f32 %v551, %v610
      %v643 = vmul.f32 %v553, %v611
      %v644 = vmul.f32 %v555, %v612
      %v645 = vmul.f32 %v557, %v613
      %v646 = vmul.f32 %v559, %v614
      %v647 = vmul.f32 %v561, %v615
      %v648 = vmul.f32 %v563, %v616
      %v649 = vmul.f32 %v565, %v617
      %v650 = vmul.f32 %v567, %v618
      %v651 = vmul.f32 %v569, %v619
      %v652 = vmul.f32 %v571, %v620
      %v653 = vmul.f32 %v573, %v621
      %v654 = vmul.f32 %v575, %v622
      %v655 = vmul.f32 %v577, %v623
      %v656 = vmul.f32 %v579, %v624
      %v657 = vmul.f32 %v581, %v625
      %v658 = vmul.f32 %v583, %v626
      %v659 = vmul.f32 %v585, %v627
      %v660 = vmul.f32 %v587, %v628
      %v661 = vmul.f32 %v589, %v629
      %v662 = vmul.f32 %v591, %v630
      %v663 = vmul.f32 %v593, %v631
      %v664 = vmul.f32 %v595, %v632
      %v665 = vmul.f32 %v597, %v633
      %v666 = vmul.f32 %v599, %v634
      %v667 = vmul.f32 %v601, %v635
      %v668 = vmul.f32 %v603, %v636
      %v669 = vmul.f32 %v605, %v637
      %v670 = vmul.f32 %v431, %v638
      %v671 = vmul.f32 %v433, %v639
      %v672 = vmul.f32 %v436, %v640
      %v673 = vmul.f32 %v438, %v641
      %v674 = vmul.f32 %v441, %v642
      %v675 = vmul.f32 %v443, %v643
      %v676 = vmul.f32 %v446, %v644
      %v677 = vmul.f32 %v448, %v645
      %v678 = vmul.f32 %v451, %v646
      %v679 = vmul.f32 %v453, %v647
      %v680 = vmul.f32 %v456, %v648
      %v681 = vmul.f32 %v458, %v649
      %v682 = vmul.f32 %v461, %v650
      %v683 = vmul.f32 %v463, %v651
      %v684 = vmul.f32 %v466, %v652
      %v685 = vmul.f32 %v468, %v653
      %v686 = vmul.f32 %v471, %v654
      %v687 = vmul.f32 %v473, %v655
      %v688 = vmul.f32 %v476, %v656
      %v689 = vmul.f32 %v478, %v657
      %v690 = vmul.f32 %v481, %v658
      %v691 = vmul.f32 %v483, %v659
      %v692 = vmul.f32 %v486, %v660
      %v693 = vmul.f32 %v488, %v661
      %v694 = vmul.f32 %v491, %v662
      %v695 = vmul.f32 %v493, %v663
      %v696 = vmul.f32 %v496, %v664
      %v697 = vmul.f32 %v498, %v665
      %v698 = vmul.f32 %v501, %v666
      %v699 = vmul.f32 %v503, %v667
      %v700 = vmul.f32 %v506, %v668
      %v701 = vmul.f32 %v508, %v669
      %v702 = vadd.f32 %v638, 2.0
      %v703 = vadd.f32 %v639, 2.0
      %v704 = vadd.f32 %v640, 2.0
      %v705 = vadd.f32 %v641, 2.0
      %v706 = vadd.f32 %v642, 2.0
      %v707 = vadd.f32 %v643, 2.0
      %v708 = vadd.f32 %v644, 2.0
      %v709 = vadd.f32 %v645, 2.0
      %v710 = vadd.f32 %v646, 2.0
      %v711 = vadd.f32 %v647, 2.0
      %v712 = vadd.f32 %v648, 2.0
      %v713 = vadd.f32 %v649, 2.0
      %v714 = vadd.f32 %v650, 2.0
      %v715 = vadd.f32 %v651, 2.0
      %v716 = vadd.f32 %v652, 2.0
      %v717 = vadd.f32 %v653, 2.0
      %v718 = vadd.f32 %v654, 2.0
      %v719 = vadd.f32 %v655, 2.0
      %v720 = vadd.f32 %v656, 2.0
      %v721 = vadd.f32 %v657, 2.0
      %v722 = vadd.f32 %v658, 2.0
      %v723 = vadd.f32 %v659, 2.0
      %v724 = vadd.f32 %v660, 2.0
      %v725 = vadd.f32 %v661, 2.0
      %v726 = vadd.f32 %v662, 2.0
      %v727 = vadd.f32 %v663, 2.0
      %v728 = vadd.f32 %v664, 2.0
      %v729 = vadd.f32 %v665, 2.0
      %v730 = vadd.f32 %v666, 2.0
      %v731 = vadd.f32 %v667, 2.0
      %v732 = vadd.f32 %v668, 2.0
      %v733 = vadd.f32 %v669, 2.0
      %v734 = vrcp.pop %v702
      %v735 = vrcp.pop %v703
      %v736 = vrcp.pop %v704
      %v737 = vrcp.pop %v705
      %v738 = vrcp.pop %v706
      %v739 = vrcp.pop %v707
      %v740 = vrcp.pop %v708
      %v741 = vrcp.pop %v709
      %v742 = vrcp.pop %v710
      %v743 = vrcp.pop %v711
      %v744 = vrcp.pop %v712
      %v745 = vrcp.pop %v713
      %v746 = vrcp.pop %v714
      %v747 = vrcp.pop %v715
      %v748 = vrcp.pop %v716
      %v749 = vrcp.pop %v717
      %v750 = vrcp.pop %v718
      %v751 = vrcp.pop %v719
      %v752 = vrcp.pop %v720
      %v753 = vrcp.pop %v721
      %v754 = vrcp.pop %v722
      %v755 = vrcp.pop %v723
      %v756 = vrcp.pop %v724
      %v757 = vrcp.pop %v725
      %v758 = vrcp.pop %v726
      %v759 = vrcp.pop %v727
      %v760 = vrcp.pop %v728
      %v761 = vrcp.pop %v729
      %v762 = vrcp.pop %v730
      %v763 = vrcp.pop %v731
      %v764 = vrcp.pop %v732
      %v765 = vrcp.pop %v733
      %v766 = vmul.f32 %v670, %v734
      %v767 = vmul.f32 %v671, %v735
      %v768 = vmul.f32 %v672, %v736
      %v769 = vmul.f32 %v673, %v737
      %v770 = vmul.f32 %v674, %v738
      %v771 = vmul.f32 %v675, %v739
      %v772 = vmul.f32 %v676, %v740
      %v773 = vmul.f32 %v677, %v741
      %v774 = vmul.f32 %v678, %v742
      %v775 = vmul.f32 %v679, %v743
      %v776 = vmul.f32 %v680, %v744
      %v777 = vmul.f32 %v681, %v745
      %v778 = vmul.f32 %v682, %v746
      %v779 = vmul.f32 %v683, %v747
      %v780 = vmul.f32 %v684, %v748
      %v781 = vmul.f32 %v685, %v749
      %v782 = vmul.f32 %v686, %v750
      %v783 = vmul.f32 %v687, %v751
      %v784 = vmul.f32 %v688, %v752
      %v785 = vmul.f32 %v689, %v753
      %v786 = vmul.f32 %v690, %v754
      %v787 = vmul.f32 %v691, %v755
      %v788 = vmul.f32 %v692, %v756
      %v789 = vmul.f32 %v693, %v757
      %v790 = vmul.f32 %v694, %v758
      %v791 = vmul.f32 %v695, %v759
      %v792 = vmul.f32 %v696, %v760
      %v793 = vmul.f32 %v697, %v761
      %v794 = vmul.f32 %v698, %v762
      %v795 = vmul.f32 %v699, %v763
      %v796 = vmul.f32 %v700, %v764
      %v797 = vmul.f32 %v701, %v765
      %vm798 = vcmp.gt.f32.partialorder %v431, 20.0
      %vm799 = vcmp.gt.f32.partialorder %v433, 20.0
      %vm800 = vcmp.gt.f32.partialorder %v436, 20.0
      %vm801 = vcmp.gt.f32.partialorder %v438, 20.0
      %vm802 = vcmp.gt.f32.partialorder %v441, 20.0
      %vm803 = vcmp.gt.f32.partialorder %v443, 20.0
      %vm804 = vcmp.gt.f32.partialorder %v446, 20.0
      %vm805 = vcmp.gt.f32.partialorder %v448, 20.0
      %vm806 = vcmp.gt.f32.partialorder %v451, 20.0
      %vm807 = vcmp.gt.f32.partialorder %v453, 20.0
      %vm808 = vcmp.gt.f32.partialorder %v456, 20.0
      %vm809 = vcmp.gt.f32.partialorder %v458, 20.0
      %vm810 = vcmp.gt.f32.partialorder %v461, 20.0
      %vm811 = vcmp.gt.f32.partialorder %v463, 20.0
      %vm812 = vcmp.gt.f32.partialorder %v466, 20.0
      %vm813 = vcmp.gt.f32.partialorder %v468, 20.0
      %vm814 = vcmp.gt.f32.partialorder %v471, 20.0
      %vm815 = vcmp.gt.f32.partialorder %v473, 20.0
      %vm816 = vcmp.gt.f32.partialorder %v476, 20.0
      %vm817 = vcmp.gt.f32.partialorder %v478, 20.0
      %vm818 = vcmp.gt.f32.partialorder %v481, 20.0
      %vm819 = vcmp.gt.f32.partialorder %v483, 20.0
      %vm820 = vcmp.gt.f32.partialorder %v486, 20.0
      %vm821 = vcmp.gt.f32.partialorder %v488, 20.0
      %vm822 = vcmp.gt.f32.partialorder %v491, 20.0
      %vm823 = vcmp.gt.f32.partialorder %v493, 20.0
      %vm824 = vcmp.gt.f32.partialorder %v496, 20.0
      %vm825 = vcmp.gt.f32.partialorder %v498, 20.0
      %vm826 = vcmp.gt.f32.partialorder %v501, 20.0
      %vm827 = vcmp.gt.f32.partialorder %v503, 20.0
      %vm828 = vcmp.gt.f32.partialorder %v506, 20.0
      %vm829 = vcmp.gt.f32.partialorder %v508, 20.0
      %v830 = vsel %vm798, %v431, %v766
      %v831 = vsel %vm799, %v433, %v767
      %v832 = vsel %vm800, %v436, %v768
      %v833 = vsel %vm801, %v438, %v769
      %v834 = vsel %vm802, %v441, %v770
      %v835 = vsel %vm803, %v443, %v771
      %v836 = vsel %vm804, %v446, %v772
      %v837 = vsel %vm805, %v448, %v773
      %v838 = vsel %vm806, %v451, %v774
      %v839 = vsel %vm807, %v453, %v775
      %v840 = vsel %vm808, %v456, %v776
      %v841 = vsel %vm809, %v458, %v777
      %v842 = vsel %vm810, %v461, %v778
      %v843 = vsel %vm811, %v463, %v779
      %v844 = vsel %vm812, %v466, %v780
      %v845 = vsel %vm813, %v468, %v781
      %v846 = vsel %vm814, %v471, %v782
      %v847 = vsel %vm815, %v473, %v783
      %v848 = vsel %vm816, %v476, %v784
      %v849 = vsel %vm817, %v478, %v785
      %v850 = vsel %vm818, %v481, %v786
      %v851 = vsel %vm819, %v483, %v787
      %v852 = vsel %vm820, %v486, %v788
      %v853 = vsel %vm821, %v488, %v789
      %v854 = vsel %vm822, %v491, %v790
      %v855 = vsel %vm823, %v493, %v791
      %v856 = vsel %vm824, %v496, %v792
      %v857 = vsel %vm825, %v498, %v793
      %v858 = vsel %vm826, %v501, %v794
      %v859 = vsel %vm827, %v503, %v795
      %v860 = vsel %vm828, %v506, %v796
      %v861 = vsel %vm829, %v508, %v797
      %862 = vst [vmem:[%s223] sm:$0xff] %v830
      %863 = vst [vmem:[%s223 + $0x8] sm:$0xff] %v831
      %864 = vst [vmem:[%s223 + $0x10] sm:$0xff] %v832
      %865 = vst [vmem:[%s223 + $0x18] sm:$0xff] %v833
      %866 = vst [vmem:[%s223 + $0x20] sm:$0xff] %v834
      %867 = vst [vmem:[%s223 + $0x28] sm:$0xff] %v835
      %868 = vst [vmem:[%s223 + $0x30] sm:$0xff] %v836
      %869 = vst [vmem:[%s223 + $0x38] sm:$0xff] %v837
      %870 = vst [vmem:[%s223 + $0x40] sm:$0xff] %v838
      %871 = vst [vmem:[%s223 + $0x48] sm:$0xff] %v839
      %872 = vst [vmem:[%s223 + $0x50] sm:$0xff] %v840
      %873 = vst [vmem:[%s223 + $0x58] sm:$0xff] %v841
      %874 = vst [vmem:[%s223 + $0x60] sm:$0xff] %v842
      %875 = vst [vmem:[%s223 + $0x68] sm:$0xff] %v843
      %876 = vst [vmem:[%s223 + $0x70] sm:$0xff] %v844
      %877 = vst [vmem:[%s223 + $0x78] sm:$0xff] %v845
      %878 = vst [vmem:[%s223 + $0x80] sm:$0xff] %v846
      %879 = vst [vmem:[%s223 + $0x88] sm:$0xff] %v847
      %880 = vst [vmem:[%s223 + $0x90] sm:$0xff] %v848
      %881 = vst [vmem:[%s223 + $0x98] sm:$0xff] %v849
      %882 = vst [vmem:[%s223 + $0xa0] sm:$0xff] %v850
      %883 = vst [vmem:[%s223 + $0xa8] sm:$0xff] %v851
      %884 = vst [vmem:[%s223 + $0xb0] sm:$0xff] %v852
      %885 = vst [vmem:[%s223 + $0xb8] sm:$0xff] %v853
      %886 = vst [vmem:[%s223 + $0xc0] sm:$0xff] %v854
      %887 = vst [vmem:[%s223 + $0xc8] sm:$0xff] %v855
      %888 = vst [vmem:[%s223 + $0xd0] sm:$0xff] %v856
      %889 = vst [vmem:[%s223 + $0xd8] sm:$0xff] %v857
      %890 = vst [vmem:[%s223 + $0xe0] sm:$0xff] %v858
      %891 = vst [vmem:[%s223 + $0xe8] sm:$0xff] %v859
      %892 = vst [vmem:[%s223 + $0xf0] sm:$0xff] %v860
      %893 = vst [vmem:[%s223 + $0xf8] sm:$0xff] %v861
      %s894 = smul.u32 32, %s18
      %p895 = scmp.lt.s32.totalorder %s894, 63
      %s896 = scalar_select %p895, %s894, 63
      %p897 = scmp.lt.s32.totalorder %s19, 0
      %s898 = scalar_select %p897, %s19, 0
      %s899 = sadd.s32 %s898, %s896
      %s900 = smul.addr %s899, 8
      %s901 = scalar_lea.vmem %s3, %s900
      // Predicated region
      $region33: #{basic_conv_forward.1} parent=31 // pred_check
        %p902 = pneg %p124
      $region34: #{basic_conv_forward.1} parent=31 // pred_check_branch
        %904 = sbr.rel (%p902) target = $region36
      $region35: #{basic_conv_forward.1} parent=31 // pred_region
        %s905 = smul.u32 32, %s18
      $region36: #{basic_conv_forward.1} parent=31 // pred_fallthru
        _
    $region32: #{basic_conv_forward.1} parent=5 // pred_fallthru
      _
    %p906 = scmp.le.s32.totalorder 2, %s9
    // Predicated region
    $region37: #{basic_conv_forward.1} parent=5 // pred_check
      %p907 = pneg %p906
    $region38: #{basic_conv_forward.1} parent=5 // pred_check_branch
      %909 = sbr.rel (%p907) target = $region40
    $region39: #{basic_conv_forward.1} parent=5 // pred_region
      %s910 = ssub.s32 %s9, 2
      // Predicated region
      $region41: #{basic_conv_forward.1} parent=39 // pred_check
        %p911 = pneg %p130
      $region42: #{basic_conv_forward.1} parent=39 // pred_check_branch
        %913 = sbr.rel (%p911) target = $region44
      $region43: #{basic_conv_forward.1} parent=39 // pred_region
        %s914 = smul.u32 32, %s20
        %p915 = scmp.lt.s32.totalorder %s914, 63
        %s916 = scalar_select %p915, %s914, 63
        %p917 = scmp.lt.s32.totalorder %s21, 0
        %s918 = scalar_select %p917, %s21, 0
        %s919 = sadd.s32 %s918, %s916
        %s920 = smul.addr %s919, 8
        %s921 = scalar_lea.vmem %s3, %s920
      $region44: #{basic_conv_forward.1} parent=39 // pred_fallthru
        _
    $region40: #{basic_conv_forward.1} parent=5 // pred_fallthru
      _
  $region6: #{basic_conv_forward.1} parent=0 // loop_footer
    %s13 = sadd.s32 1, %s9
  $region7: #{basic_conv_forward.1} parent=0 // loop_footer_branch
    %8 = sbr.rel target = $region3
  $region8: #{basic_conv_forward.1} parent=0 // loop_exit
    _

</llo_original>
